<compile_context>
chip_gen: v6e
topology: v6e:2x2x1
jax: 0.10.0
libtpu: 0.0.40
codegen_flags: <defaults>
</compile_context>

<pallas_src>
import functools

import jax
import jax.numpy as jnp
from jax.experimental import pallas as pl
from jax.experimental.pallas import tpu as pltpu


def _lstm_chunk_kernel(x_ref, w_ref, b_ref, h0_ref, c0_ref, out_ref,
                       h_sc, c_sc, *, hidden_dim, chunk, seq_len, matmul_dtype):
    s = pl.program_id(0)
    n_chunks = pl.num_programs(0)
    H = hidden_dim
    B = h_sc.shape[0]

    @pl.when(s == 0)
    def _init():
        h_sc[...] = h0_ref[...].astype(jnp.float32)
        c_sc[...] = c0_ref[...].astype(jnp.float32)

    # Loop-invariant loads, hoisted out of the per-timestep loop.
    w = w_ref[...]                                                    # (L+H, 4H)
    bias = jnp.broadcast_to(b_ref[...].astype(jnp.float32), (B, 4 * H))

    h = h_sc[...]                                                     # f32 (B, H)
    c = c_sc[...]                                                     # f32 (B, H)

    rem = seq_len % chunk  # static python int

    for tt in range(chunk):  # statically unrolled recurrence within the chunk
        x_t = x_ref[tt].astype(matmul_dtype)                          # (B, L)
        xh = jnp.concatenate([x_t, h.astype(matmul_dtype)], axis=1)   # (B, L+H)
        # Single fused MXU matmul per timestep, f32 accumulation.
        gates = jnp.dot(xh, w, preferred_element_type=jnp.float32) + bias

        i_g = jax.nn.sigmoid(gates[:, 0 * H:1 * H])
        f_g = jax.nn.sigmoid(gates[:, 1 * H:2 * H])
        g_g = jnp.tanh(gates[:, 2 * H:3 * H])
        o_g = jax.nn.sigmoid(gates[:, 3 * H:4 * H])

        c_new = f_g * c + i_g * g_g
        h_new = o_g * jnp.tanh(c_new)

        if rem != 0 and tt >= rem:
            # Only the last (partial) chunk contains steps past the true end of
            # the sequence; those steps must not update the state.
            valid = s < n_chunks - 1
            h = jnp.where(valid, h_new, h)
            c = jnp.where(valid, c_new, c)
        else:
            h, c = h_new, c_new

    h_sc[...] = h
    c_sc[...] = c

    @pl.when(s == n_chunks - 1)
    def _finalize():
        out_ref[...] = h.astype(out_ref.dtype)


def lstm_final_hidden(x_btl, w_ih, w_hh, b_ih, b_hh, h0, c0,
                      *, chunk=8, matmul_dtype=jnp.float32):
    """x_btl: (batch, seq, latentDim).  Returns h_n[-1]: (batch, hiddenDim)."""
    B, S, L = x_btl.shape
    H = w_hh.shape[1]

    if S == 0:
        # Empty sequence: the grid would never write the output.
        return h0.astype(x_btl.dtype)

    chunk = max(1, min(chunk, S))
    n_chunks = pl.cdiv(S, chunk)

    # Time-major x so per-timestep access in the kernel is a leading-axis slice.
    x_tbl = jnp.transpose(x_btl, (1, 0, 2))                         # (S, B, L)

    # Fused, pre-transposed weights: [W_ih^T ; W_hh^T] -> (L+H, 4H).
    w_fused = jnp.concatenate(
        [jnp.transpose(w_ih, (1, 0)), jnp.transpose(w_hh, (1, 0))], axis=0
    ).astype(matmul_dtype)
    bias = (b_ih + b_hh).reshape(1, 4 * H).astype(jnp.float32)

    kernel = functools.partial(
        _lstm_chunk_kernel, hidden_dim=H, chunk=chunk, seq_len=S,
        matmul_dtype=matmul_dtype)

    return pl.pallas_call(
        kernel,
        out_shape=jax.ShapeDtypeStruct((B, H), x_btl.dtype),
        grid_spec=pltpu.PrefetchScalarGridSpec(
            num_scalar_prefetch=0,
            grid=(n_chunks,),
            in_specs=[
                pl.BlockSpec((chunk, B, L), lambda s: (s, 0, 0)),    # x chunk
                pl.BlockSpec((L + H, 4 * H), lambda s: (0, 0)),      # fused W
                pl.BlockSpec((1, 4 * H), lambda s: (0, 0)),          # bias
                pl.BlockSpec((B, H), lambda s: (0, 0)),              # h0
                pl.BlockSpec((B, H), lambda s: (0, 0)),              # c0
            ],
            out_specs=pl.BlockSpec((B, H), lambda s: (0, 0)),
            scratch_shapes=[
                pltpu.VMEM((B, H), jnp.float32),  # h carry
                pltpu.VMEM((B, H), jnp.float32),  # c carry
            ],
        ),
        compiler_params=pltpu.CompilerParams(
            # Time recurrence + accumulator-style output => must stay sequential.
            dimension_semantics=("arbitrary",),
        ),
    )(x_tbl, w_fused, bias, h0, c0)


def _reference_lstm_final_hidden(x_btl, w_ih, w_hh, b_ih, b_hh, h0, c0):
    """Pure-JAX reference matching torch.nn.LSTM (single layer, batch_first)."""
    B, S, L = x_btl.shape
    H = w_hh.shape[1]
    h = h0.astype(jnp.float32)
    c = c0.astype(jnp.float32)
    bias = (b_ih + b_hh).astype(jnp.float32)
    for t in range(S):
        x_t = x_btl[:, t, :].astype(jnp.float32)
        gates = x_t @ w_ih.T.astype(jnp.float32) + h @ w_hh.T.astype(jnp.float32) + bias
        i_g = jax.nn.sigmoid(gates[:, 0 * H:1 * H])
        f_g = jax.nn.sigmoid(gates[:, 1 * H:2 * H])
        g_g = jnp.tanh(gates[:, 2 * H:3 * H])
        o_g = jax.nn.sigmoid(gates[:, 3 * H:4 * H])
        c = f_g * c + i_g * g_g
        h = o_g * jnp.tanh(c)
    return h


def _orthogonal_like_init(key, layers, batch, hidden):
    # torch.nn.init.orthogonal_ on a (layers, batch, hidden) tensor flattens to
    # (layers, batch*hidden) and orthogonalizes rows; reproduce deterministically.
    flat = jax.random.normal(key, (layers, batch * hidden), dtype=jnp.float32)
    q, _ = jnp.linalg.qr(flat.T)          # (batch*hidden, layers), orthonormal cols
    return q.T.reshape(layers, batch, hidden)


if __name__ == "__main__":
    batch, latent_dim, hidden_dim = 2, 4, 32

    key = jax.random.PRNGKey(0)
    k_x, k_x2, k_wih, k_whh, k_bih, k_bhh, k_h0, k_c0 = jax.random.split(key, 8)

    # PyTorch LSTM default init: uniform(-1/sqrt(H), 1/sqrt(H))
    bound = 1.0 / jnp.sqrt(jnp.float32(hidden_dim))
    w_ih = jax.random.uniform(k_wih, (4 * hidden_dim, latent_dim), minval=-bound, maxval=bound)
    w_hh = jax.random.uniform(k_whh, (4 * hidden_dim, hidden_dim), minval=-bound, maxval=bound)
    b_ih = jax.random.uniform(k_bih, (4 * hidden_dim,), minval=-bound, maxval=bound)
    b_hh = jax.random.uniform(k_bhh, (4 * hidden_dim,), minval=-bound, maxval=bound)

    # reset_hidden_states: orthogonal-initialized h0/c0, shape (num_layers=1, B, H)
    h0 = _orthogonal_like_init(k_h0, 1, batch, hidden_dim)[0]
    c0 = _orthogonal_like_init(k_c0, 1, batch, hidden_dim)[0]

    # Case 1: seq fits in a single chunk -> grid collapses to one step.
    seq_len = 8
    x = jax.random.normal(k_x, (batch, seq_len, latent_dim), dtype=jnp.float32)
    out = jax.block_until_ready(lstm_final_hidden(x, w_ih, w_hh, b_ih, b_hh, h0, c0))
    ref = _reference_lstm_final_hidden(x, w_ih, w_hh, b_ih, b_hh, h0, c0)
    assert out.shape == (batch, hidden_dim)
    assert jnp.allclose(out, ref, atol=1e-4, rtol=1e-4), "mismatch (single-chunk case)"

    # Case 2: multi-chunk grid (state carried across grid steps in VMEM scratch).
    seq_len2 = 16
    x2 = jax.random.normal(k_x2, (batch, seq_len2, latent_dim), dtype=jnp.float32)
    out2 = jax.block_until_ready(
        lstm_final_hidden(x2, w_ih, w_hh, b_ih, b_hh, h0, c0, chunk=8))
    ref2 = _reference_lstm_final_hidden(x2, w_ih, w_hh, b_ih, b_hh, h0, c0)
    assert out2.shape == (batch, hidden_dim)
    assert jnp.allclose(out2, ref2, atol=1e-4, rtol=1e-4), "mismatch (multi-chunk case)"

    print("KERNEL_OK")
</pallas_src>

<mosaic_0001>
module attributes {stable_mosaic.version = 11 : i64} {
  func.func @_lstm_chunk_kernel(%arg0: i32, %arg1: memref<8x2x4xf32, #tpu.memory_space<vmem>>, %arg2: memref<36x128xf32, #tpu.memory_space<vmem>>, %arg3: memref<1x128xf32, #tpu.memory_space<vmem>>, %arg4: memref<2x32xf32, #tpu.memory_space<vmem>>, %arg5: memref<2x32xf32, #tpu.memory_space<vmem>>, %arg6: memref<2x32xf32, #tpu.memory_space<vmem>>, %arg7: memref<2x32xf32, #tpu.memory_space<vmem>>, %arg8: memref<2x32xf32, #tpu.memory_space<vmem>>) attributes {dimension_semantics = [#tpu.dimension_semantics<arbitrary>], iteration_bounds = array<i64: 1>, scalar_prefetch = 0 : i64, scratch_operands = 2 : i64, tpu.core_type = #tpu.core_type<tc>, window_params = [{transform_indices = @transform_0, window_bounds = array<i64: 8, 2, 4>}, {pipeline_mode = #tpu.pipeline_mode<synchronous>, transform_indices = @transform_1, window_bounds = array<i64: 36, 128>}, {pipeline_mode = #tpu.pipeline_mode<synchronous>, transform_indices = @transform_2, window_bounds = array<i64: 1, 128>}, {pipeline_mode = #tpu.pipeline_mode<synchronous>, transform_indices = @transform_3, window_bounds = array<i64: 2, 32>}, {pipeline_mode = #tpu.pipeline_mode<synchronous>, transform_indices = @transform_4, window_bounds = array<i64: 2, 32>}, {pipeline_mode = #tpu.pipeline_mode<synchronous>, transform_indices = @transform_5, window_bounds = array<i64: 2, 32>}]} {
    %c0_i32 = arith.constant 0 : i32
    %0 = arith.cmpi eq, %arg0, %c0_i32 : i32
    %1 = arith.extui %0 : i1 to i32
    %c0_i32_0 = arith.constant 0 : i32
    %2 = arith.cmpi ne, %1, %c0_i32_0 : i32
    scf.if %2 {
      %c0_62 = arith.constant 0 : index
      %c0_63 = arith.constant 0 : index
      %254 = vector.load %arg4[%c0_62, %c0_63] : memref<2x32xf32, #tpu.memory_space<vmem>>, vector<2x32xf32>
      %c0_64 = arith.constant 0 : index
      %c0_65 = arith.constant 0 : index
      %255 = vector.load %arg7[%c0_64, %c0_65] : memref<2x32xf32, #tpu.memory_space<vmem>>, vector<2x32xf32>
      tpu.vector_store %arg7[%c0_64, %c0_65], %254 {strides = array<i32>} : memref<2x32xf32, #tpu.memory_space<vmem>>, vector<2x32xf32>,
      %c0_66 = arith.constant 0 : index
      %c0_67 = arith.constant 0 : index
      %256 = vector.load %arg5[%c0_66, %c0_67] : memref<2x32xf32, #tpu.memory_space<vmem>>, vector<2x32xf32>
      %c0_68 = arith.constant 0 : index
      %c0_69 = arith.constant 0 : index
      %257 = vector.load %arg8[%c0_68, %c0_69] : memref<2x32xf32, #tpu.memory_space<vmem>>, vector<2x32xf32>
      tpu.vector_store %arg8[%c0_68, %c0_69], %256 {strides = array<i32>} : memref<2x32xf32, #tpu.memory_space<vmem>>, vector<2x32xf32>,
    } else {
    }
    %c0 = arith.constant 0 : index
    %c0_1 = arith.constant 0 : index
    %3 = vector.load %arg2[%c0, %c0_1] : memref<36x128xf32, #tpu.memory_space<vmem>>, vector<36x128xf32>
    %c0_2 = arith.constant 0 : index
    %c0_3 = arith.constant 0 : index
    %4 = vector.load %arg3[%c0_2, %c0_3] : memref<1x128xf32, #tpu.memory_space<vmem>>, vector<1x128xf32>
    %5 = vector.shape_cast %4 : vector<1x128xf32> to vector<1x128xf32>
    %6 = vector.broadcast %5 : vector<1x128xf32> to vector<2x128xf32>
    %c0_4 = arith.constant 0 : index
    %c0_5 = arith.constant 0 : index
    %7 = vector.load %arg7[%c0_4, %c0_5] : memref<2x32xf32, #tpu.memory_space<vmem>>, vector<2x32xf32>
    %c0_6 = arith.constant 0 : index
    %c0_7 = arith.constant 0 : index
    %8 = vector.load %arg8[%c0_6, %c0_7] : memref<2x32xf32, #tpu.memory_space<vmem>>, vector<2x32xf32>
    %c0_8 = arith.constant 0 : index
    %c0_9 = arith.constant 0 : index
    %c0_10 = arith.constant 0 : index
    %9 = vector.load %arg1[%c0_8, %c0_9, %c0_10] : memref<8x2x4xf32, #tpu.memory_space<vmem>>, vector<1x2x4xf32>
    %10 = vector.shape_cast %9 : vector<1x2x4xf32> to vector<2x4xf32>
    %11 = tpu.concatenate %10, %7 in 1 : vector<2x4xf32>, vector<2x32xf32> -> vector<2x36xf32>
    %cst = arith.constant dense<0.000000e+00> : vector<2x128xf32>
    %12 = tpu.matmul %11, %3, %cst {dimension_numbers = #tpu.dot_dimension_numbers<[1], [0], [0], [1], [0, 0, 1, 1], [], []>} : vector<2x36xf32>, vector<36x128xf32>, vector<2x128xf32> -> vector<2x128xf32>
    %13 = arith.addf %12, %6 : vector<2x128xf32>
    %14 = vector.extract_strided_slice %13 {offsets = [0, 0], sizes = [2, 32], strides = [1, 1]} : vector<2x128xf32> to vector<2x32xf32>
    %15 = arith.negf %14 : vector<2x32xf32>
    %16 = math.exp %15 : vector<2x32xf32>
    %cst_11 = arith.constant 1.000000e+00 : f32
    %17 = vector.broadcast %cst_11 : f32 to vector<2x32xf32>
    %18 = arith.addf %17, %16 : vector<2x32xf32>
    %19 = arith.divf %17, %18 : vector<2x32xf32>
    %20 = vector.extract_strided_slice %13 {offsets = [0, 32], sizes = [2, 32], strides = [1, 1]} : vector<2x128xf32> to vector<2x32xf32>
    %21 = arith.negf %20 : vector<2x32xf32>
    %22 = math.exp %21 : vector<2x32xf32>
    %cst_12 = arith.constant 1.000000e+00 : f32
    %23 = vector.broadcast %cst_12 : f32 to vector<2x32xf32>
    %24 = arith.addf %23, %22 : vector<2x32xf32>
    %25 = arith.divf %23, %24 : vector<2x32xf32>
    %26 = vector.extract_strided_slice %13 {offsets = [0, 64], sizes = [2, 32], strides = [1, 1]} : vector<2x128xf32> to vector<2x32xf32>
    %27 = math.tanh %26 : vector<2x32xf32>
    %28 = vector.extract_strided_slice %13 {offsets = [0, 96], sizes = [2, 32], strides = [1, 1]} : vector<2x128xf32> to vector<2x32xf32>
    %29 = arith.negf %28 : vector<2x32xf32>
    %30 = math.exp %29 : vector<2x32xf32>
    %cst_13 = arith.constant 1.000000e+00 : f32
    %31 = vector.broadcast %cst_13 : f32 to vector<2x32xf32>
    %32 = arith.addf %31, %30 : vector<2x32xf32>
    %33 = arith.divf %31, %32 : vector<2x32xf32>
    %34 = arith.mulf %25, %8 : vector<2x32xf32>
    %35 = arith.mulf %19, %27 : vector<2x32xf32>
    %36 = arith.addf %34, %35 : vector<2x32xf32>
    %37 = math.tanh %36 : vector<2x32xf32>
    %38 = arith.mulf %33, %37 : vector<2x32xf32>
    %c1 = arith.constant 1 : index
    %c0_14 = arith.constant 0 : index
    %c0_15 = arith.constant 0 : index
    %39 = vector.load %arg1[%c1, %c0_14, %c0_15] : memref<8x2x4xf32, #tpu.memory_space<vmem>>, vector<1x2x4xf32>
    %40 = vector.shape_cast %39 : vector<1x2x4xf32> to vector<2x4xf32>
    %41 = tpu.concatenate %40, %38 in 1 : vector<2x4xf32>, vector<2x32xf32> -> vector<2x36xf32>
    %cst_16 = arith.constant dense<0.000000e+00> : vector<2x128xf32>
    %42 = tpu.matmul %41, %3, %cst_16 {dimension_numbers = #tpu.dot_dimension_numbers<[1], [0], [0], [1], [0, 0, 1, 1], [], []>} : vector<2x36xf32>, vector<36x128xf32>, vector<2x128xf32> -> vector<2x128xf32>
    %43 = arith.addf %42, %6 : vector<2x128xf32>
    %44 = vector.extract_strided_slice %43 {offsets = [0, 0], sizes = [2, 32], strides = [1, 1]} : vector<2x128xf32> to vector<2x32xf32>
    %45 = arith.negf %44 : vector<2x32xf32>
    %46 = math.exp %45 : vector<2x32xf32>
    %cst_17 = arith.constant 1.000000e+00 : f32
    %47 = vector.broadcast %cst_17 : f32 to vector<2x32xf32>
    %48 = arith.addf %47, %46 : vector<2x32xf32>
    %49 = arith.divf %47, %48 : vector<2x32xf32>
    %50 = vector.extract_strided_slice %43 {offsets = [0, 32], sizes = [2, 32], strides = [1, 1]} : vector<2x128xf32> to vector<2x32xf32>
    %51 = arith.negf %50 : vector<2x32xf32>
    %52 = math.exp %51 : vector<2x32xf32>
    %cst_18 = arith.constant 1.000000e+00 : f32
    %53 = vector.broadcast %cst_18 : f32 to vector<2x32xf32>
    %54 = arith.addf %53, %52 : vector<2x32xf32>
    %55 = arith.divf %53, %54 : vector<2x32xf32>
    %56 = vector.extract_strided_slice %43 {offsets = [0, 64], sizes = [2, 32], strides = [1, 1]} : vector<2x128xf32> to vector<2x32xf32>
    %57 = math.tanh %56 : vector<2x32xf32>
    %58 = vector.extract_strided_slice %43 {offsets = [0, 96], sizes = [2, 32], strides = [1, 1]} : vector<2x128xf32> to vector<2x32xf32>
    %59 = arith.negf %58 : vector<2x32xf32>
    %60 = math.exp %59 : vector<2x32xf32>
    %cst_19 = arith.constant 1.000000e+00 : f32
    %61 = vector.broadcast %cst_19 : f32 to vector<2x32xf32>
    %62 = arith.addf %61, %60 : vector<2x32xf32>
    %63 = arith.divf %61, %62 : vector<2x32xf32>
    %64 = arith.mulf %55, %36 : vector<2x32xf32>
    %65 = arith.mulf %49, %57 : vector<2x32xf32>
    %66 = arith.addf %64, %65 : vector<2x32xf32>
    %67 = math.tanh %66 : vector<2x32xf32>
    %68 = arith.mulf %63, %67 : vector<2x32xf32>
    %c2 = arith.constant 2 : index
    %c0_20 = arith.constant 0 : index
    %c0_21 = arith.constant 0 : index
    %69 = vector.load %arg1[%c2, %c0_20, %c0_21] : memref<8x2x4xf32, #tpu.memory_space<vmem>>, vector<1x2x4xf32>
    %70 = vector.shape_cast %69 : vector<1x2x4xf32> to vector<2x4xf32>
    %71 = tpu.concatenate %70, %68 in 1 : vector<2x4xf32>, vector<2x32xf32> -> vector<2x36xf32>
    %cst_22 = arith.constant dense<0.000000e+00> : vector<2x128xf32>
    %72 = tpu.matmul %71, %3, %cst_22 {dimension_numbers = #tpu.dot_dimension_numbers<[1], [0], [0], [1], [0, 0, 1, 1], [], []>} : vector<2x36xf32>, vector<36x128xf32>, vector<2x128xf32> -> vector<2x128xf32>
    %73 = arith.addf %72, %6 : vector<2x128xf32>
    %74 = vector.extract_strided_slice %73 {offsets = [0, 0], sizes = [2, 32], strides = [1, 1]} : vector<2x128xf32> to vector<2x32xf32>
    %75 = arith.negf %74 : vector<2x32xf32>
    %76 = math.exp %75 : vector<2x32xf32>
    %cst_23 = arith.constant 1.000000e+00 : f32
    %77 = vector.broadcast %cst_23 : f32 to vector<2x32xf32>
    %78 = arith.addf %77, %76 : vector<2x32xf32>
    %79 = arith.divf %77, %78 : vector<2x32xf32>
    %80 = vector.extract_strided_slice %73 {offsets = [0, 32], sizes = [2, 32], strides = [1, 1]} : vector<2x128xf32> to vector<2x32xf32>
    %81 = arith.negf %80 : vector<2x32xf32>
    %82 = math.exp %81 : vector<2x32xf32>
    %cst_24 = arith.constant 1.000000e+00 : f32
    %83 = vector.broadcast %cst_24 : f32 to vector<2x32xf32>
    %84 = arith.addf %83, %82 : vector<2x32xf32>
    %85 = arith.divf %83, %84 : vector<2x32xf32>
    %86 = vector.extract_strided_slice %73 {offsets = [0, 64], sizes = [2, 32], strides = [1, 1]} : vector<2x128xf32> to vector<2x32xf32>
    %87 = math.tanh %86 : vector<2x32xf32>
    %88 = vector.extract_strided_slice %73 {offsets = [0, 96], sizes = [2, 32], strides = [1, 1]} : vector<2x128xf32> to vector<2x32xf32>
    %89 = arith.negf %88 : vector<2x32xf32>
    %90 = math.exp %89 : vector<2x32xf32>
    %cst_25 = arith.constant 1.000000e+00 : f32
    %91 = vector.broadcast %cst_25 : f32 to vector<2x32xf32>
    %92 = arith.addf %91, %90 : vector<2x32xf32>
    %93 = arith.divf %91, %92 : vector<2x32xf32>
    %94 = arith.mulf %85, %66 : vector<2x32xf32>
    %95 = arith.mulf %79, %87 : vector<2x32xf32>
    %96 = arith.addf %94, %95 : vector<2x32xf32>
    %97 = math.tanh %96 : vector<2x32xf32>
    %98 = arith.mulf %93, %97 : vector<2x32xf32>
    %c3 = arith.constant 3 : index
    %c0_26 = arith.constant 0 : index
    %c0_27 = arith.constant 0 : index
    %99 = vector.load %arg1[%c3, %c0_26, %c0_27] : memref<8x2x4xf32, #tpu.memory_space<vmem>>, vector<1x2x4xf32>
    %100 = vector.shape_cast %99 : vector<1x2x4xf32> to vector<2x4xf32>
    %101 = tpu.concatenate %100, %98 in 1 : vector<2x4xf32>, vector<2x32xf32> -> vector<2x36xf32>
    %cst_28 = arith.constant dense<0.000000e+00> : vector<2x128xf32>
    %102 = tpu.matmul %101, %3, %cst_28 {dimension_numbers = #tpu.dot_dimension_numbers<[1], [0], [0], [1], [0, 0, 1, 1], [], []>} : vector<2x36xf32>, vector<36x128xf32>, vector<2x128xf32> -> vector<2x128xf32>
    %103 = arith.addf %102, %6 : vector<2x128xf32>
    %104 = vector.extract_strided_slice %103 {offsets = [0, 0], sizes = [2, 32], strides = [1, 1]} : vector<2x128xf32> to vector<2x32xf32>
    %105 = arith.negf %104 : vector<2x32xf32>
    %106 = math.exp %105 : vector<2x32xf32>
    %cst_29 = arith.constant 1.000000e+00 : f32
    %107 = vector.broadcast %cst_29 : f32 to vector<2x32xf32>
    %108 = arith.addf %107, %106 : vector<2x32xf32>
    %109 = arith.divf %107, %108 : vector<2x32xf32>
    %110 = vector.extract_strided_slice %103 {offsets = [0, 32], sizes = [2, 32], strides = [1, 1]} : vector<2x128xf32> to vector<2x32xf32>
    %111 = arith.negf %110 : vector<2x32xf32>
    %112 = math.exp %111 : vector<2x32xf32>
    %cst_30 = arith.constant 1.000000e+00 : f32
    %113 = vector.broadcast %cst_30 : f32 to vector<2x32xf32>
    %114 = arith.addf %113, %112 : vector<2x32xf32>
    %115 = arith.divf %113, %114 : vector<2x32xf32>
    %116 = vector.extract_strided_slice %103 {offsets = [0, 64], sizes = [2, 32], strides = [1, 1]} : vector<2x128xf32> to vector<2x32xf32>
    %117 = math.tanh %116 : vector<2x32xf32>
    %118 = vector.extract_strided_slice %103 {offsets = [0, 96], sizes = [2, 32], strides = [1, 1]} : vector<2x128xf32> to vector<2x32xf32>
    %119 = arith.negf %118 : vector<2x32xf32>
    %120 = math.exp %119 : vector<2x32xf32>
    %cst_31 = arith.constant 1.000000e+00 : f32
    %121 = vector.broadcast %cst_31 : f32 to vector<2x32xf32>
    %122 = arith.addf %121, %120 : vector<2x32xf32>
    %123 = arith.divf %121, %122 : vector<2x32xf32>
    %124 = arith.mulf %115, %96 : vector<2x32xf32>
    %125 = arith.mulf %109, %117 : vector<2x32xf32>
    %126 = arith.addf %124, %125 : vector<2x32xf32>
    %127 = math.tanh %126 : vector<2x32xf32>
    %128 = arith.mulf %123, %127 : vector<2x32xf32>
    %c4 = arith.constant 4 : index
    %c0_32 = arith.constant 0 : index
    %c0_33 = arith.constant 0 : index
    %129 = vector.load %arg1[%c4, %c0_32, %c0_33] : memref<8x2x4xf32, #tpu.memory_space<vmem>>, vector<1x2x4xf32>
    %130 = vector.shape_cast %129 : vector<1x2x4xf32> to vector<2x4xf32>
    %131 = tpu.concatenate %130, %128 in 1 : vector<2x4xf32>, vector<2x32xf32> -> vector<2x36xf32>
    %cst_34 = arith.constant dense<0.000000e+00> : vector<2x128xf32>
    %132 = tpu.matmul %131, %3, %cst_34 {dimension_numbers = #tpu.dot_dimension_numbers<[1], [0], [0], [1], [0, 0, 1, 1], [], []>} : vector<2x36xf32>, vector<36x128xf32>, vector<2x128xf32> -> vector<2x128xf32>
    %133 = arith.addf %132, %6 : vector<2x128xf32>
    %134 = vector.extract_strided_slice %133 {offsets = [0, 0], sizes = [2, 32], strides = [1, 1]} : vector<2x128xf32> to vector<2x32xf32>
    %135 = arith.negf %134 : vector<2x32xf32>
    %136 = math.exp %135 : vector<2x32xf32>
    %cst_35 = arith.constant 1.000000e+00 : f32
    %137 = vector.broadcast %cst_35 : f32 to vector<2x32xf32>
    %138 = arith.addf %137, %136 : vector<2x32xf32>
    %139 = arith.divf %137, %138 : vector<2x32xf32>
    %140 = vector.extract_strided_slice %133 {offsets = [0, 32], sizes = [2, 32], strides = [1, 1]} : vector<2x128xf32> to vector<2x32xf32>
    %141 = arith.negf %140 : vector<2x32xf32>
    %142 = math.exp %141 : vector<2x32xf32>
    %cst_36 = arith.constant 1.000000e+00 : f32
    %143 = vector.broadcast %cst_36 : f32 to vector<2x32xf32>
    %144 = arith.addf %143, %142 : vector<2x32xf32>
    %145 = arith.divf %143, %144 : vector<2x32xf32>
    %146 = vector.extract_strided_slice %133 {offsets = [0, 64], sizes = [2, 32], strides = [1, 1]} : vector<2x128xf32> to vector<2x32xf32>
    %147 = math.tanh %146 : vector<2x32xf32>
    %148 = vector.extract_strided_slice %133 {offsets = [0, 96], sizes = [2, 32], strides = [1, 1]} : vector<2x128xf32> to vector<2x32xf32>
    %149 = arith.negf %148 : vector<2x32xf32>
    %150 = math.exp %149 : vector<2x32xf32>
    %cst_37 = arith.constant 1.000000e+00 : f32
    %151 = vector.broadcast %cst_37 : f32 to vector<2x32xf32>
    %152 = arith.addf %151, %150 : vector<2x32xf32>
    %153 = arith.divf %151, %152 : vector<2x32xf32>
    %154 = arith.mulf %145, %126 : vector<2x32xf32>
    %155 = arith.mulf %139, %147 : vector<2x32xf32>
    %156 = arith.addf %154, %155 : vector<2x32xf32>
    %157 = math.tanh %156 : vector<2x32xf32>
    %158 = arith.mulf %153, %157 : vector<2x32xf32>
    %c5 = arith.constant 5 : index
    %c0_38 = arith.constant 0 : index
    %c0_39 = arith.constant 0 : index
    %159 = vector.load %arg1[%c5, %c0_38, %c0_39] : memref<8x2x4xf32, #tpu.memory_space<vmem>>, vector<1x2x4xf32>
    %160 = vector.shape_cast %159 : vector<1x2x4xf32> to vector<2x4xf32>
    %161 = tpu.concatenate %160, %158 in 1 : vector<2x4xf32>, vector<2x32xf32> -> vector<2x36xf32>
    %cst_40 = arith.constant dense<0.000000e+00> : vector<2x128xf32>
    %162 = tpu.matmul %161, %3, %cst_40 {dimension_numbers = #tpu.dot_dimension_numbers<[1], [0], [0], [1], [0, 0, 1, 1], [], []>} : vector<2x36xf32>, vector<36x128xf32>, vector<2x128xf32> -> vector<2x128xf32>
    %163 = arith.addf %162, %6 : vector<2x128xf32>
    %164 = vector.extract_strided_slice %163 {offsets = [0, 0], sizes = [2, 32], strides = [1, 1]} : vector<2x128xf32> to vector<2x32xf32>
    %165 = arith.negf %164 : vector<2x32xf32>
    %166 = math.exp %165 : vector<2x32xf32>
    %cst_41 = arith.constant 1.000000e+00 : f32
    %167 = vector.broadcast %cst_41 : f32 to vector<2x32xf32>
    %168 = arith.addf %167, %166 : vector<2x32xf32>
    %169 = arith.divf %167, %168 : vector<2x32xf32>
    %170 = vector.extract_strided_slice %163 {offsets = [0, 32], sizes = [2, 32], strides = [1, 1]} : vector<2x128xf32> to vector<2x32xf32>
    %171 = arith.negf %170 : vector<2x32xf32>
    %172 = math.exp %171 : vector<2x32xf32>
    %cst_42 = arith.constant 1.000000e+00 : f32
    %173 = vector.broadcast %cst_42 : f32 to vector<2x32xf32>
    %174 = arith.addf %173, %172 : vector<2x32xf32>
    %175 = arith.divf %173, %174 : vector<2x32xf32>
    %176 = vector.extract_strided_slice %163 {offsets = [0, 64], sizes = [2, 32], strides = [1, 1]} : vector<2x128xf32> to vector<2x32xf32>
    %177 = math.tanh %176 : vector<2x32xf32>
    %178 = vector.extract_strided_slice %163 {offsets = [0, 96], sizes = [2, 32], strides = [1, 1]} : vector<2x128xf32> to vector<2x32xf32>
    %179 = arith.negf %178 : vector<2x32xf32>
    %180 = math.exp %179 : vector<2x32xf32>
    %cst_43 = arith.constant 1.000000e+00 : f32
    %181 = vector.broadcast %cst_43 : f32 to vector<2x32xf32>
    %182 = arith.addf %181, %180 : vector<2x32xf32>
    %183 = arith.divf %181, %182 : vector<2x32xf32>
    %184 = arith.mulf %175, %156 : vector<2x32xf32>
    %185 = arith.mulf %169, %177 : vector<2x32xf32>
    %186 = arith.addf %184, %185 : vector<2x32xf32>
    %187 = math.tanh %186 : vector<2x32xf32>
    %188 = arith.mulf %183, %187 : vector<2x32xf32>
    %c6 = arith.constant 6 : index
    %c0_44 = arith.constant 0 : index
    %c0_45 = arith.constant 0 : index
    %189 = vector.load %arg1[%c6, %c0_44, %c0_45] : memref<8x2x4xf32, #tpu.memory_space<vmem>>, vector<1x2x4xf32>
    %190 = vector.shape_cast %189 : vector<1x2x4xf32> to vector<2x4xf32>
    %191 = tpu.concatenate %190, %188 in 1 : vector<2x4xf32>, vector<2x32xf32> -> vector<2x36xf32>
    %cst_46 = arith.constant dense<0.000000e+00> : vector<2x128xf32>
    %192 = tpu.matmul %191, %3, %cst_46 {dimension_numbers = #tpu.dot_dimension_numbers<[1], [0], [0], [1], [0, 0, 1, 1], [], []>} : vector<2x36xf32>, vector<36x128xf32>, vector<2x128xf32> -> vector<2x128xf32>
    %193 = arith.addf %192, %6 : vector<2x128xf32>
    %194 = vector.extract_strided_slice %193 {offsets = [0, 0], sizes = [2, 32], strides = [1, 1]} : vector<2x128xf32> to vector<2x32xf32>
    %195 = arith.negf %194 : vector<2x32xf32>
    %196 = math.exp %195 : vector<2x32xf32>
    %cst_47 = arith.constant 1.000000e+00 : f32
    %197 = vector.broadcast %cst_47 : f32 to vector<2x32xf32>
    %198 = arith.addf %197, %196 : vector<2x32xf32>
    %199 = arith.divf %197, %198 : vector<2x32xf32>
    %200 = vector.extract_strided_slice %193 {offsets = [0, 32], sizes = [2, 32], strides = [1, 1]} : vector<2x128xf32> to vector<2x32xf32>
    %201 = arith.negf %200 : vector<2x32xf32>
    %202 = math.exp %201 : vector<2x32xf32>
    %cst_48 = arith.constant 1.000000e+00 : f32
    %203 = vector.broadcast %cst_48 : f32 to vector<2x32xf32>
    %204 = arith.addf %203, %202 : vector<2x32xf32>
    %205 = arith.divf %203, %204 : vector<2x32xf32>
    %206 = vector.extract_strided_slice %193 {offsets = [0, 64], sizes = [2, 32], strides = [1, 1]} : vector<2x128xf32> to vector<2x32xf32>
    %207 = math.tanh %206 : vector<2x32xf32>
    %208 = vector.extract_strided_slice %193 {offsets = [0, 96], sizes = [2, 32], strides = [1, 1]} : vector<2x128xf32> to vector<2x32xf32>
    %209 = arith.negf %208 : vector<2x32xf32>
    %210 = math.exp %209 : vector<2x32xf32>
    %cst_49 = arith.constant 1.000000e+00 : f32
    %211 = vector.broadcast %cst_49 : f32 to vector<2x32xf32>
    %212 = arith.addf %211, %210 : vector<2x32xf32>
    %213 = arith.divf %211, %212 : vector<2x32xf32>
    %214 = arith.mulf %205, %186 : vector<2x32xf32>
    %215 = arith.mulf %199, %207 : vector<2x32xf32>
    %216 = arith.addf %214, %215 : vector<2x32xf32>
    %217 = math.tanh %216 : vector<2x32xf32>
    %218 = arith.mulf %213, %217 : vector<2x32xf32>
    %c7 = arith.constant 7 : index
    %c0_50 = arith.constant 0 : index
    %c0_51 = arith.constant 0 : index
    %219 = vector.load %arg1[%c7, %c0_50, %c0_51] : memref<8x2x4xf32, #tpu.memory_space<vmem>>, vector<1x2x4xf32>
    %220 = vector.shape_cast %219 : vector<1x2x4xf32> to vector<2x4xf32>
    %221 = tpu.concatenate %220, %218 in 1 : vector<2x4xf32>, vector<2x32xf32> -> vector<2x36xf32>
    %cst_52 = arith.constant dense<0.000000e+00> : vector<2x128xf32>
    %222 = tpu.matmul %221, %3, %cst_52 {dimension_numbers = #tpu.dot_dimension_numbers<[1], [0], [0], [1], [0, 0, 1, 1], [], []>} : vector<2x36xf32>, vector<36x128xf32>, vector<2x128xf32> -> vector<2x128xf32>
    %223 = arith.addf %222, %6 : vector<2x128xf32>
    %224 = vector.extract_strided_slice %223 {offsets = [0, 0], sizes = [2, 32], strides = [1, 1]} : vector<2x128xf32> to vector<2x32xf32>
    %225 = arith.negf %224 : vector<2x32xf32>
    %226 = math.exp %225 : vector<2x32xf32>
    %cst_53 = arith.constant 1.000000e+00 : f32
    %227 = vector.broadcast %cst_53 : f32 to vector<2x32xf32>
    %228 = arith.addf %227, %226 : vector<2x32xf32>
    %229 = arith.divf %227, %228 : vector<2x32xf32>
    %230 = vector.extract_strided_slice %223 {offsets = [0, 32], sizes = [2, 32], strides = [1, 1]} : vector<2x128xf32> to vector<2x32xf32>
    %231 = arith.negf %230 : vector<2x32xf32>
    %232 = math.exp %231 : vector<2x32xf32>
    %cst_54 = arith.constant 1.000000e+00 : f32
    %233 = vector.broadcast %cst_54 : f32 to vector<2x32xf32>
    %234 = arith.addf %233, %232 : vector<2x32xf32>
    %235 = arith.divf %233, %234 : vector<2x32xf32>
    %236 = vector.extract_strided_slice %223 {offsets = [0, 64], sizes = [2, 32], strides = [1, 1]} : vector<2x128xf32> to vector<2x32xf32>
    %237 = math.tanh %236 : vector<2x32xf32>
    %238 = vector.extract_strided_slice %223 {offsets = [0, 96], sizes = [2, 32], strides = [1, 1]} : vector<2x128xf32> to vector<2x32xf32>
    %239 = arith.negf %238 : vector<2x32xf32>
    %240 = math.exp %239 : vector<2x32xf32>
    %cst_55 = arith.constant 1.000000e+00 : f32
    %241 = vector.broadcast %cst_55 : f32 to vector<2x32xf32>
    %242 = arith.addf %241, %240 : vector<2x32xf32>
    %243 = arith.divf %241, %242 : vector<2x32xf32>
    %244 = arith.mulf %235, %216 : vector<2x32xf32>
    %245 = arith.mulf %229, %237 : vector<2x32xf32>
    %246 = arith.addf %244, %245 : vector<2x32xf32>
    %247 = math.tanh %246 : vector<2x32xf32>
    %248 = arith.mulf %243, %247 : vector<2x32xf32>
    %c0_56 = arith.constant 0 : index
    %c0_57 = arith.constant 0 : index
    %249 = vector.load %arg7[%c0_56, %c0_57] : memref<2x32xf32, #tpu.memory_space<vmem>>, vector<2x32xf32>
    tpu.vector_store %arg7[%c0_56, %c0_57], %248 {strides = array<i32>} : memref<2x32xf32, #tpu.memory_space<vmem>>, vector<2x32xf32>,
    %c0_58 = arith.constant 0 : index
    %c0_59 = arith.constant 0 : index
    %250 = vector.load %arg8[%c0_58, %c0_59] : memref<2x32xf32, #tpu.memory_space<vmem>>, vector<2x32xf32>
    tpu.vector_store %arg8[%c0_58, %c0_59], %246 {strides = array<i32>} : memref<2x32xf32, #tpu.memory_space<vmem>>, vector<2x32xf32>,
    %c0_i32_60 = arith.constant 0 : i32
    %251 = arith.cmpi eq, %arg0, %c0_i32_60 : i32
    %252 = arith.extui %251 : i1 to i32
    %c0_i32_61 = arith.constant 0 : i32
    %253 = arith.cmpi ne, %252, %c0_i32_61 : i32
    scf.if %253 {
      %c0_62 = arith.constant 0 : index
      %c0_63 = arith.constant 0 : index
      %254 = vector.load %arg6[%c0_62, %c0_63] : memref<2x32xf32, #tpu.memory_space<vmem>>, vector<2x32xf32>
      tpu.vector_store %arg6[%c0_62, %c0_63], %248 {strides = array<i32>} : memref<2x32xf32, #tpu.memory_space<vmem>>, vector<2x32xf32>,
    } else {
    }
    return
  }
  func.func @transform_0(%arg0: i32) -> (i32, i32, i32) {
    %c0_i32 = arith.constant 0 : i32
    %c0_i32_0 = arith.constant 0 : i32
    %c0_i32_1 = arith.constant 0 : i32
    return %arg0, %c0_i32, %c0_i32_0 : i32, i32, i32
  }
  func.func @transform_1(%arg0: i32) -> (i32, i32) {
    %c0_i32 = arith.constant 0 : i32
    %c0_i32_0 = arith.constant 0 : i32
    %c0_i32_1 = arith.constant 0 : i32
    return %c0_i32, %c0_i32_0 : i32, i32
  }
  func.func @transform_2(%arg0: i32) -> (i32, i32) {
    %c0_i32 = arith.constant 0 : i32
    %c0_i32_0 = arith.constant 0 : i32
    %c0_i32_1 = arith.constant 0 : i32
    return %c0_i32, %c0_i32_0 : i32, i32
  }
  func.func @transform_3(%arg0: i32) -> (i32, i32) {
    %c0_i32 = arith.constant 0 : i32
    %c0_i32_0 = arith.constant 0 : i32
    %c0_i32_1 = arith.constant 0 : i32
    return %c0_i32, %c0_i32_0 : i32, i32
  }
  func.func @transform_4(%arg0: i32) -> (i32, i32) {
    %c0_i32 = arith.constant 0 : i32
    %c0_i32_0 = arith.constant 0 : i32
    %c0_i32_1 = arith.constant 0 : i32
    return %c0_i32, %c0_i32_0 : i32, i32
  }
  func.func @transform_5(%arg0: i32) -> (i32, i32) {
    %c0_i32 = arith.constant 0 : i32
    %c0_i32_0 = arith.constant 0 : i32
    %c0_i32_1 = arith.constant 0 : i32
    return %c0_i32, %c0_i32_0 : i32, i32
  }
}

</mosaic_0001>

<llo_original>
// kernel: tpu_custom_call.1
$region0: #{tpu_custom_call.1}
  #allocation0 [shape = 'u32[]', space=smem, size = 0x4, offset = 0x4, fixed_abs, tag = 'smem constant byte address 0x4 - core index']
  #allocation1 [shape = 'u32[144,128]{1,0:T(1,128)}', space=vmem, size = 0x12000, scoped, tag = 'internal scratch']
  #allocation2 [shape = 'f32[2,32]{1,0:T(2,128)}', space=vmem, size = 0x400, scoped, tag = 'scratch operand']
  #allocation3 [shape = 'f32[2,32]{1,0:T(2,128)}', space=vmem, size = 0x400, scoped, tag = 'scratch operand']
  %s0 = inlined_call_operand.vmem [shape: f32[8,2,4], index: 0, kind: input, shape index: {}]
  %s1 = inlined_call_operand.hbm [shape: f32[36,128], index: 1, kind: input, shape index: {}]
  %s2 = inlined_call_operand.vmem [shape: f32[1,128], index: 2, kind: input, shape index: {}]
  %s3 = inlined_call_operand.vmem [shape: f32[2,32], index: 3, kind: input, shape index: {}]
  %s4 = inlined_call_operand.vmem [shape: f32[2,32], index: 4, kind: input, shape index: {}]
  %s5 = inlined_call_operand.hbm [shape: f32[2,32], index: 5, kind: output, shape index: {}]
  %s6 = sld [smem:[#allocation0]]
  $region42: #{tpu_custom_call.1} parent=0
    _
  %s8 = ssub.s32 1, %s6
  %s9 = scalar_select 0, %s8, %s6
  $region1: #{tpu_custom_call.1} parent=0
    #allocation4 [shape = 'u8[20480]{0}', space=vmem, size = 0x5000, scoped, tag = 'input window, operand 1, single buffered']
    #allocation5 [shape = 's32[1]{0}', space=sflag, size = 0x4, scoped, tag = 'scoped memory for tpu_custom_call.1']
    #allocation6 [shape = 's32[1]{0}', space=sflag, size = 0x4, scoped, tag = 'scoped memory for tpu_custom_call.1']
    #allocation7 [shape = 'u8[1024]{0}', space=vmem, size = 0x400, scoped, tag = 'output window, operand 0, single buffered']
    %10 = vsyncpa [#allocation5], 0
    %11 = vsyncpa [#allocation6], 0
    // Predicated region
    $region2: #{tpu_custom_call.1} parent=1 // pred_check
      _
    $region3: #{tpu_custom_call.1} parent=1 // pred_check_branch
      %13 = sbr.rel (0) target = $region5
    $region4: #{tpu_custom_call.1} parent=1 // pred_region
      _
    $region5: #{tpu_custom_call.1} parent=1 // pred_fallthru
      _
    // Predicated region
    $region6: #{tpu_custom_call.1} parent=1 // pred_check
      _
    $region7: #{tpu_custom_call.1} parent=1 // pred_check_branch
      %15 = sbr.rel (0) target = $region9
    $region8: #{tpu_custom_call.1} parent=1 // pred_region
      %s17 = ssub.s32 640, 640
      %18 = vsyncadd [#allocation5], %s17
      %s19 = sshll.u32 [#allocation4], 4
      %s20 = int_to_ptr.vmem [resolvable:$true] %s19
      %25 = dma.hbm_to_vmem [thread:$0]  %s1, 640, %s20, [#allocation5], 128, 128, 8
    $region9: #{tpu_custom_call.1} parent=1 // pred_fallthru
      _
    // Predicated region
    $region10: #{tpu_custom_call.1} parent=1 // pred_check
      _
    $region11: #{tpu_custom_call.1} parent=1 // pred_check_branch
      %27 = sbr.rel (0) target = $region13
    $region12: #{tpu_custom_call.1} parent=1 // pred_region
      _
    $region13: #{tpu_custom_call.1} parent=1 // pred_fallthru
      _
    // Predicated region
    $region14: #{tpu_custom_call.1} parent=1 // pred_check
      _
    $region15: #{tpu_custom_call.1} parent=1 // pred_check_branch
      %29 = sbr.rel (0) target = $region17
    $region16: #{tpu_custom_call.1} parent=1 // pred_region
      _
    $region17: #{tpu_custom_call.1} parent=1 // pred_fallthru
      _
    // Predicated region
    $region18: #{tpu_custom_call.1} parent=1 // pred_check
      _
    $region19: #{tpu_custom_call.1} parent=1 // pred_check_branch
      %31 = sbr.rel (0) target = $region21
    $region20: #{tpu_custom_call.1} parent=1 // pred_region
      _
    $region21: #{tpu_custom_call.1} parent=1 // pred_fallthru
      _
    // Predicated region
    $region22: #{tpu_custom_call.1} parent=1 // pred_check
      _
    $region23: #{tpu_custom_call.1} parent=1 // pred_check_branch
      %33 = sbr.rel (0) target = $region25
    $region24: #{tpu_custom_call.1} parent=1 // pred_region
      %34 = dma.done [#allocation5], 640
    $region25: #{tpu_custom_call.1} parent=1 // pred_fallthru
      _
    %p35 = scmp.eq.s32.totalorder 0, 0
    // Predicated region
    $region26: #{tpu_custom_call.1} parent=1 // pred_check
      %p36 = pneg %p35
    $region27: #{tpu_custom_call.1} parent=1 // pred_check_branch
      %38 = sbr.rel (%p36) target = $region29
    $region28: #{tpu_custom_call.1} parent=1 // pred_region
      %v39 = vld [vmem:[%s3] sm:$0x3]
      %vm40 = vcmask 254976
      %41 = vst.msk [vmem:[#allocation2] sm:$0x3] %vm40, %v39
      %v42 = vld [vmem:[%s4] sm:$0x3]
      %43 = vst.msk [vmem:[#allocation3] sm:$0x3] %vm40, %v42
    $region29: #{tpu_custom_call.1} parent=1 // pred_fallthru
      _
    %v44 = vld [vmem:[#allocation4] sm:$0xff]
    %v45 = vld [vmem:[#allocation4 + $0x8] sm:$0xff]
    %v46 = vld [vmem:[#allocation4 + $0x10] sm:$0xff]
    %v47 = vld [vmem:[#allocation4 + $0x18] sm:$0xff]
    %v48 = vld [vmem:[#allocation4 + $0x20] sm:$0xf]
    %v49 = vld [vmem:[%s2] sm:$0x1]
    %v51 = vlaneseq
    %v52 = vshrl.u32 %v51, 7
    %v53 = vsub.s32 0, %v52
    %v54 = vrot.slane %v49, %v53
    %v56 = vld [vmem:[#allocation2] sm:$0x3]
    %v57 = vld [vmem:[#allocation3] sm:$0x3]
    %v58 = vld [vmem:[%s0] sm:$0x3]
    %60 = vrot.lane.b32.xlu0 %v56, 4
    %v61 = vpop.permute.xlu0 %60
    %vm63 = vcmask 31744
    %v64 = vsel %vm63, %v58, %v61
    %vm65 = vcmask 293888
    %v67 = vsel %vm65, %v64, 0
    %vm69 = vcmask 1043456
    %v71 = vsel %vm69, %v48, 0
    %73 = vmatprep.subr.mxu0 0.0
    %74 = vmatpush1.msra.mxu0 0.0
    %75 = vmatprep.subr.mxu0 0.0
    %76 = vmatpush1.msra.mxu0 0.0
    %77 = vmatprep.subr.mxu0 0.0
    %78 = vmatpush1.msra.mxu0 0.0
    %79 = vmatprep.subr.mxu0 0.0
    %80 = vmatpush1.msra.mxu0 0.0
    %81 = vmatprep.subr.mxu0 0.0
    %82 = vmatpush1.msra.mxu0 0.0
    %83 = vmatprep.subr.mxu0 0.0
    %84 = vmatpush1.msra.mxu0 0.0
    %85 = vmatprep.subr.mxu0 0.0
    %86 = vmatpush1.msra.mxu0 0.0
    %87 = vmatprep.subr.mxu0 0.0
    %88 = vmatpush1.msra.mxu0 0.0
    %89 = vmatprep.subr.mxu0 0.0
    %90 = vmatpush1.msra.mxu0 0.0
    %91 = vmatprep.subr.mxu0 0.0
    %92 = vmatpush1.msra.mxu0 0.0
    %93 = vmatprep.subr.mxu0 0.0
    %94 = vmatpush1.msra.mxu0 0.0
    %95 = vmatprep.subr.mxu0 0.0
    %96 = vmatpush1.msra.mxu0 %v71
    %97 = vmatprep.subr.mxu0 0.0
    %98 = vmatpush1.msra.mxu0 %v47
    %99 = vmatprep.subr.mxu0 0.0
    %100 = vmatpush1.msra.mxu0 %v46
    %101 = vmatprep.subr.mxu0 0.0
    %102 = vmatpush1.msra.mxu0 %v45
    %103 = vmatprep.subr.mxu0 0.0
    %104 = vmatpush1.msra.mxu0 %v44
    %105 = vmatprep.subr.mxu0 0.0
    %106 = vmatpush2.msra.mxu0 0.0
    %107 = vmatprep.subr.mxu0 0.0
    %108 = vmatpush2.msra.mxu0 0.0
    %109 = vmatprep.subr.mxu0 0.0
    %110 = vmatpush2.msra.mxu0 0.0
    %111 = vmatprep.subr.mxu0 0.0
    %112 = vmatpush2.msra.mxu0 0.0
    %113 = vmatprep.subr.mxu0 0.0
    %114 = vmatpush2.msra.mxu0 0.0
    %115 = vmatprep.subr.mxu0 0.0
    %116 = vmatpush2.msra.mxu0 0.0
    %117 = vmatprep.subr.mxu0 0.0
    %118 = vmatpush2.msra.mxu0 0.0
    %119 = vmatprep.subr.mxu0 0.0
    %120 = vmatpush2.msra.mxu0 0.0
    %121 = vmatprep.subr.mxu0 0.0
    %122 = vmatpush2.msra.mxu0 0.0
    %123 = vmatprep.subr.mxu0 0.0
    %124 = vmatpush2.msra.mxu0 0.0
    %125 = vmatprep.subr.mxu0 0.0
    %126 = vmatpush2.msra.mxu0 0.0
    %127 = vmatprep.subr.mxu0 0.0
    %128 = vmatpush2.msra.mxu0 0.0
    %129 = vmatprep.subr.mxu0 0.0
    %130 = vmatpush2.msra.mxu0 0.0
    %131 = vmatprep.subr.mxu0 0.0
    %132 = vmatpush2.msra.mxu0 0.0
    %133 = vmatprep.subr.mxu0 0.0
    %134 = vmatpush2.msra.mxu0 0.0
    %135 = vmatprep.subr.mxu0 0.0
    %136 = vmatpush2.msra.mxu0 0.0
    %137 = vmatprep.mubr.f32.mxu0 0.0
    %138 = vmatmul.mubr.f32.gmra.mxu0 %v67
    %v139 = vpop.f32.mrf.mxu0
    %v140 = vadd.f32 %v54, %v139
    %v141 = vpop.f32.mrf.mxu0
    %142 = vdwg.mxu0
    %v143 = vxor.u32 %v140, 2147483648
    %v144 = vmul.f32 %v143, 1.442695
    %v145 = vpow.pop %v144
    %v146 = vadd.f32 %v145, 1.0
    %v147 = vrcp.pop %v146
    %v148 = vmul.f32 1.0, %v147
    %v149 = vtanh.pop %v140
    %151 = vrot.lane.b32.xlu0 %v57, 32
    %v152 = vpop.permute.xlu0 %151
    %v154 = vmul.f32 %v148, %v152
    %156 = vrot.lane.b32.xlu0 %v149, 64
    %v157 = vpop.permute.xlu0 %156
    %v159 = vmul.f32 %v148, %v157
    %161 = vrot.lane.b32.xlu0 %v159, 32
    %v162 = vpop.permute.xlu0 %161
    %v164 = vadd.f32 %v154, %v162
    %v165 = vtanh.pop %v164
    %167 = vrot.lane.b32.xlu0 %v165, 64
    %v168 = vpop.permute.xlu0 %167
    %v170 = vmul.f32 %v148, %v168
    %s171 = scalar_lea.vmem %s0, 2
    %v172 = vld [vmem:[%s171] sm:$0x3]
    %174 = vrot.lane.b32.xlu0 %v170, 36
    %v175 = vpop.permute.xlu0 %174
    %v177 = vsel %vm63, %v172, %v175
    %v179 = vsel %vm65, %v177, 0
    %181 = vmatprep.subr.mxu0 0.0
    %182 = vmatpush1.msra.mxu0 0.0
    %183 = vmatprep.subr.mxu0 0.0
    %184 = vmatpush1.msra.mxu0 0.0
    %185 = vmatprep.subr.mxu0 0.0
    %186 = vmatpush1.msra.mxu0 0.0
    %187 = vmatprep.subr.mxu0 0.0
    %188 = vmatpush1.msra.mxu0 0.0
    %189 = vmatprep.subr.mxu0 0.0
    %190 = vmatpush1.msra.mxu0 0.0
    %191 = vmatprep.subr.mxu0 0.0
    %192 = vmatpush1.msra.mxu0 0.0
    %193 = vmatprep.subr.mxu0 0.0
    %194 = vmatpush1.msra.mxu0 0.0
    %195 = vmatprep.subr.mxu0 0.0
    %196 = vmatpush1.msra.mxu0 0.0
    %197 = vmatprep.subr.mxu0 0.0
    %198 = vmatpush1.msra.mxu0 0.0
    %199 = vmatprep.subr.mxu0 0.0
    %200 = vmatpush1.msra.mxu0 0.0
    %201 = vmatprep.subr.mxu0 0.0
    %202 = vmatpush1.msra.mxu0 0.0
    %203 = vmatprep.subr.mxu0 0.0
    %204 = vmatpush1.msra.mxu0 %v71
    %205 = vmatprep.subr.mxu0 0.0
    %206 = vmatpush1.msra.mxu0 %v47
    %207 = vmatprep.subr.mxu0 0.0
    %208 = vmatpush1.msra.mxu0 %v46
    %209 = vmatprep.subr.mxu0 0.0
    %210 = vmatpush1.msra.mxu0 %v45
    %211 = vmatprep.subr.mxu0 0.0
    %212 = vmatpush1.msra.mxu0 %v44
    %213 = vmatprep.subr.mxu0 0.0
    %214 = vmatpush2.msra.mxu0 0.0
    %215 = vmatprep.subr.mxu0 0.0
    %216 = vmatpush2.msra.mxu0 0.0
    %217 = vmatprep.subr.mxu0 0.0
    %218 = vmatpush2.msra.mxu0 0.0
    %219 = vmatprep.subr.mxu0 0.0
    %220 = vmatpush2.msra.mxu0 0.0
    %221 = vmatprep.subr.mxu0 0.0
    %222 = vmatpush2.msra.mxu0 0.0
    %223 = vmatprep.subr.mxu0 0.0
    %224 = vmatpush2.msra.mxu0 0.0
    %225 = vmatprep.subr.mxu0 0.0
    %226 = vmatpush2.msra.mxu0 0.0
    %227 = vmatprep.subr.mxu0 0.0
    %228 = vmatpush2.msra.mxu0 0.0
    %229 = vmatprep.subr.mxu0 0.0
    %230 = vmatpush2.msra.mxu0 0.0
    %231 = vmatprep.subr.mxu0 0.0
    %232 = vmatpush2.msra.mxu0 0.0
    %233 = vmatprep.subr.mxu0 0.0
    %234 = vmatpush2.msra.mxu0 0.0
    %235 = vmatprep.subr.mxu0 0.0
    %236 = vmatpush2.msra.mxu0 0.0
    %237 = vmatprep.subr.mxu0 0.0
    %238 = vmatpush2.msra.mxu0 0.0
    %239 = vmatprep.subr.mxu0 0.0
    %240 = vmatpush2.msra.mxu0 0.0
    %241 = vmatprep.subr.mxu0 0.0
    %242 = vmatpush2.msra.mxu0 0.0
    %243 = vmatprep.subr.mxu0 0.0
    %244 = vmatpush2.msra.mxu0 0.0
    %245 = vmatprep.mubr.f32.mxu0 0.0
    %246 = vmatmul.mubr.f32.gmra.mxu0 %v179
    %v247 = vpop.f32.mrf.mxu0
    %v248 = vadd.f32 %v54, %v247
    %v249 = vpop.f32.mrf.mxu0
    %250 = vdwg.mxu0
    %v251 = vxor.u32 %v248, 2147483648
    %v252 = vmul.f32 %v251, 1.442695
    %v253 = vpow.pop %v252
    %v254 = vadd.f32 %v253, 1.0
    %v255 = vrcp.pop %v254
    %v256 = vmul.f32 1.0, %v255
    %v257 = vtanh.pop %v248
    %v258 = vmul.f32 %v256, %v164
    %260 = vrot.lane.b32.xlu0 %v257, 64
    %v261 = vpop.permute.xlu0 %260
    %v263 = vmul.f32 %v256, %v261
    %265 = vrot.lane.b32.xlu0 %v263, 32
    %v266 = vpop.permute.xlu0 %265
    %v268 = vadd.f32 %v258, %v266
    %v269 = vtanh.pop %v268
    %271 = vrot.lane.b32.xlu0 %v269, 64
    %v272 = vpop.permute.xlu0 %271
    %v274 = vmul.f32 %v256, %v272
    %s275 = scalar_lea.vmem %s0, 4
    %v276 = vld [vmem:[%s275] sm:$0x3]
    %278 = vrot.lane.b32.xlu0 %v274, 36
    %v279 = vpop.permute.xlu0 %278
    %v281 = vsel %vm63, %v276, %v279
    %v283 = vsel %vm65, %v281, 0
    %285 = vmatprep.subr.mxu0 0.0
    %286 = vmatpush1.msra.mxu0 0.0
    %287 = vmatprep.subr.mxu0 0.0
    %288 = vmatpush1.msra.mxu0 0.0
    %289 = vmatprep.subr.mxu0 0.0
    %290 = vmatpush1.msra.mxu0 0.0
    %291 = vmatprep.subr.mxu0 0.0
    %292 = vmatpush1.msra.mxu0 0.0
    %293 = vmatprep.subr.mxu0 0.0
    %294 = vmatpush1.msra.mxu0 0.0
    %295 = vmatprep.subr.mxu0 0.0
    %296 = vmatpush1.msra.mxu0 0.0
    %297 = vmatprep.subr.mxu0 0.0
    %298 = vmatpush1.msra.mxu0 0.0
    %299 = vmatprep.subr.mxu0 0.0
    %300 = vmatpush1.msra.mxu0 0.0
    %301 = vmatprep.subr.mxu0 0.0
    %302 = vmatpush1.msra.mxu0 0.0
    %303 = vmatprep.subr.mxu0 0.0
    %304 = vmatpush1.msra.mxu0 0.0
    %305 = vmatprep.subr.mxu0 0.0
    %306 = vmatpush1.msra.mxu0 0.0
    %307 = vmatprep.subr.mxu0 0.0
    %308 = vmatpush1.msra.mxu0 %v71
    %309 = vmatprep.subr.mxu0 0.0
    %310 = vmatpush1.msra.mxu0 %v47
    %311 = vmatprep.subr.mxu0 0.0
    %312 = vmatpush1.msra.mxu0 %v46
    %313 = vmatprep.subr.mxu0 0.0
    %314 = vmatpush1.msra.mxu0 %v45
    %315 = vmatprep.subr.mxu0 0.0
    %316 = vmatpush1.msra.mxu0 %v44
    %317 = vmatprep.subr.mxu0 0.0
    %318 = vmatpush2.msra.mxu0 0.0
    %319 = vmatprep.subr.mxu0 0.0
    %320 = vmatpush2.msra.mxu0 0.0
    %321 = vmatprep.subr.mxu0 0.0
    %322 = vmatpush2.msra.mxu0 0.0
    %323 = vmatprep.subr.mxu0 0.0
    %324 = vmatpush2.msra.mxu0 0.0
    %325 = vmatprep.subr.mxu0 0.0
    %326 = vmatpush2.msra.mxu0 0.0
    %327 = vmatprep.subr.mxu0 0.0
    %328 = vmatpush2.msra.mxu0 0.0
    %329 = vmatprep.subr.mxu0 0.0
    %330 = vmatpush2.msra.mxu0 0.0
    %331 = vmatprep.subr.mxu0 0.0
    %332 = vmatpush2.msra.mxu0 0.0
    %333 = vmatprep.subr.mxu0 0.0
    %334 = vmatpush2.msra.mxu0 0.0
    %335 = vmatprep.subr.mxu0 0.0
    %336 = vmatpush2.msra.mxu0 0.0
    %337 = vmatprep.subr.mxu0 0.0
    %338 = vmatpush2.msra.mxu0 0.0
    %339 = vmatprep.subr.mxu0 0.0
    %340 = vmatpush2.msra.mxu0 0.0
    %341 = vmatprep.subr.mxu0 0.0
    %342 = vmatpush2.msra.mxu0 0.0
    %343 = vmatprep.subr.mxu0 0.0
    %344 = vmatpush2.msra.mxu0 0.0
    %345 = vmatprep.subr.mxu0 0.0
    %346 = vmatpush2.msra.mxu0 0.0
    %347 = vmatprep.subr.mxu0 0.0
    %348 = vmatpush2.msra.mxu0 0.0
    %349 = vmatprep.mubr.f32.mxu0 0.0
    %350 = vmatmul.mubr.f32.gmra.mxu0 %v283
    %v351 = vpop.f32.mrf.mxu0
    %v352 = vadd.f32 %v54, %v351
    %v353 = vpop.f32.mrf.mxu0
    %354 = vdwg.mxu0
    %v355 = vxor.u32 %v352, 2147483648
    %v356 = vmul.f32 %v355, 1.442695
    %v357 = vpow.pop %v356
    %v358 = vadd.f32 %v357, 1.0
    %v359 = vrcp.pop %v358
    %v360 = vmul.f32 1.0, %v359
    %v361 = vtanh.pop %v352
    %v362 = vmul.f32 %v360, %v268
    %364 = vrot.lane.b32.xlu0 %v361, 64
    %v365 = vpop.permute.xlu0 %364
    %v367 = vmul.f32 %v360, %v365
    %369 = vrot.lane.b32.xlu0 %v367, 32
    %v370 = vpop.permute.xlu0 %369
    %v372 = vadd.f32 %v362, %v370
    %v373 = vtanh.pop %v372
    %375 = vrot.lane.b32.xlu0 %v373, 64
    %v376 = vpop.permute.xlu0 %375
    %v378 = vmul.f32 %v360, %v376
    %s379 = scalar_lea.vmem %s0, 6
    %v380 = vld [vmem:[%s379] sm:$0x3]
    %382 = vrot.lane.b32.xlu0 %v378, 36
    %v383 = vpop.permute.xlu0 %382
    %v385 = vsel %vm63, %v380, %v383
    %v387 = vsel %vm65, %v385, 0
    %389 = vmatprep.subr.mxu0 0.0
    %390 = vmatpush1.msra.mxu0 0.0
    %391 = vmatprep.subr.mxu0 0.0
    %392 = vmatpush1.msra.mxu0 0.0
    %393 = vmatprep.subr.mxu0 0.0
    %394 = vmatpush1.msra.mxu0 0.0
    %395 = vmatprep.subr.mxu0 0.0
    %396 = vmatpush1.msra.mxu0 0.0
    %397 = vmatprep.subr.mxu0 0.0
    %398 = vmatpush1.msra.mxu0 0.0
    %399 = vmatprep.subr.mxu0 0.0
    %400 = vmatpush1.msra.mxu0 0.0
    %401 = vmatprep.subr.mxu0 0.0
    %402 = vmatpush1.msra.mxu0 0.0
    %403 = vmatprep.subr.mxu0 0.0
    %404 = vmatpush1.msra.mxu0 0.0
    %405 = vmatprep.subr.mxu0 0.0
    %406 = vmatpush1.msra.mxu0 0.0
    %407 = vmatprep.subr.mxu0 0.0
    %408 = vmatpush1.msra.mxu0 0.0
    %409 = vmatprep.subr.mxu0 0.0
    %410 = vmatpush1.msra.mxu0 0.0
    %411 = vmatprep.subr.mxu0 0.0
    %412 = vmatpush1.msra.mxu0 %v71
    %413 = vmatprep.subr.mxu0 0.0
    %414 = vmatpush1.msra.mxu0 %v47
    %415 = vmatprep.subr.mxu0 0.0
    %416 = vmatpush1.msra.mxu0 %v46
    %417 = vmatprep.subr.mxu0 0.0
    %418 = vmatpush1.msra.mxu0 %v45
    %419 = vmatprep.subr.mxu0 0.0
    %420 = vmatpush1.msra.mxu0 %v44
    %421 = vmatprep.subr.mxu0 0.0
    %422 = vmatpush2.msra.mxu0 0.0
    %423 = vmatprep.subr.mxu0 0.0
    %424 = vmatpush2.msra.mxu0 0.0
    %425 = vmatprep.subr.mxu0 0.0
    %426 = vmatpush2.msra.mxu0 0.0
    %427 = vmatprep.subr.mxu0 0.0
    %428 = vmatpush2.msra.mxu0 0.0
    %429 = vmatprep.subr.mxu0 0.0
    %430 = vmatpush2.msra.mxu0 0.0
    %431 = vmatprep.subr.mxu0 0.0
    %432 = vmatpush2.msra.mxu0 0.0
    %433 = vmatprep.subr.mxu0 0.0
    %434 = vmatpush2.msra.mxu0 0.0
    %435 = vmatprep.subr.mxu0 0.0
    %436 = vmatpush2.msra.mxu0 0.0
    %437 = vmatprep.subr.mxu0 0.0
    %438 = vmatpush2.msra.mxu0 0.0
    %439 = vmatprep.subr.mxu0 0.0
    %440 = vmatpush2.msra.mxu0 0.0
    %441 = vmatprep.subr.mxu0 0.0
    %442 = vmatpush2.msra.mxu0 0.0
    %443 = vmatprep.subr.mxu0 0.0
    %444 = vmatpush2.msra.mxu0 0.0
    %445 = vmatprep.subr.mxu0 0.0
    %446 = vmatpush2.msra.mxu0 0.0
    %447 = vmatprep.subr.mxu0 0.0
    %448 = vmatpush2.msra.mxu0 0.0
    %449 = vmatprep.subr.mxu0 0.0
    %450 = vmatpush2.msra.mxu0 0.0
    %451 = vmatprep.subr.mxu0 0.0
    %452 = vmatpush2.msra.mxu0 0.0
    %453 = vmatprep.mubr.f32.mxu0 0.0
    %454 = vmatmul.mubr.f32.gmra.mxu0 %v387
    %v455 = vpop.f32.mrf.mxu0
    %v456 = vadd.f32 %v54, %v455
    %v457 = vpop.f32.mrf.mxu0
    %458 = vdwg.mxu0
    %v459 = vxor.u32 %v456, 2147483648
    %v460 = vmul.f32 %v459, 1.442695
    %v461 = vpow.pop %v460
    %v462 = vadd.f32 %v461, 1.0
    %v463 = vrcp.pop %v462
    %v464 = vmul.f32 1.0, %v463
    %v465 = vtanh.pop %v456
    %v466 = vmul.f32 %v464, %v372
    %468 = vrot.lane.b32.xlu0 %v465, 64
    %v469 = vpop.permute.xlu0 %468
    %v471 = vmul.f32 %v464, %v469
    %473 = vrot.lane.b32.xlu0 %v471, 32
    %v474 = vpop.permute.xlu0 %473
    %v476 = vadd.f32 %v466, %v474
    %v477 = vtanh.pop %v476
    %479 = vrot.lane.b32.xlu0 %v477, 64
    %v480 = vpop.permute.xlu0 %479
    %v482 = vmul.f32 %v464, %v480
    %s483 = scalar_lea.vmem %s0, 8
    %v484 = vld [vmem:[%s483] sm:$0x3]
    %486 = vrot.lane.b32.xlu0 %v482, 36
    %v487 = vpop.permute.xlu0 %486
    %v489 = vsel %vm63, %v484, %v487
    %v491 = vsel %vm65, %v489, 0
    %493 = vmatprep.subr.mxu0 0.0
    %494 = vmatpush1.msra.mxu0 0.0
    %495 = vmatprep.subr.mxu0 0.0
    %496 = vmatpush1.msra.mxu0 0.0
    %497 = vmatprep.subr.mxu0 0.0
    %498 = vmatpush1.msra.mxu0 0.0
    %499 = vmatprep.subr.mxu0 0.0
    %500 = vmatpush1.msra.mxu0 0.0
    %501 = vmatprep.subr.mxu0 0.0
    %502 = vmatpush1.msra.mxu0 0.0
    %503 = vmatprep.subr.mxu0 0.0
    %504 = vmatpush1.msra.mxu0 0.0
    %505 = vmatprep.subr.mxu0 0.0
    %506 = vmatpush1.msra.mxu0 0.0
    %507 = vmatprep.subr.mxu0 0.0
    %508 = vmatpush1.msra.mxu0 0.0
    %509 = vmatprep.subr.mxu0 0.0
    %510 = vmatpush1.msra.mxu0 0.0
    %511 = vmatprep.subr.mxu0 0.0
    %512 = vmatpush1.msra.mxu0 0.0
    %513 = vmatprep.subr.mxu0 0.0
    %514 = vmatpush1.msra.mxu0 0.0
    %515 = vmatprep.subr.mxu0 0.0
    %516 = vmatpush1.msra.mxu0 %v71
    %517 = vmatprep.subr.mxu0 0.0
    %518 = vmatpush1.msra.mxu0 %v47
    %519 = vmatprep.subr.mxu0 0.0
    %520 = vmatpush1.msra.mxu0 %v46
    %521 = vmatprep.subr.mxu0 0.0
    %522 = vmatpush1.msra.mxu0 %v45
    %523 = vmatprep.subr.mxu0 0.0
    %524 = vmatpush1.msra.mxu0 %v44
    %525 = vmatprep.subr.mxu0 0.0
    %526 = vmatpush2.msra.mxu0 0.0
    %527 = vmatprep.subr.mxu0 0.0
    %528 = vmatpush2.msra.mxu0 0.0
    %529 = vmatprep.subr.mxu0 0.0
    %530 = vmatpush2.msra.mxu0 0.0
    %531 = vmatprep.subr.mxu0 0.0
    %532 = vmatpush2.msra.mxu0 0.0
    %533 = vmatprep.subr.mxu0 0.0
    %534 = vmatpush2.msra.mxu0 0.0
    %535 = vmatprep.subr.mxu0 0.0
    %536 = vmatpush2.msra.mxu0 0.0
    %537 = vmatprep.subr.mxu0 0.0
    %538 = vmatpush2.msra.mxu0 0.0
    %539 = vmatprep.subr.mxu0 0.0
    %540 = vmatpush2.msra.mxu0 0.0
    %541 = vmatprep.subr.mxu0 0.0
    %542 = vmatpush2.msra.mxu0 0.0
    %543 = vmatprep.subr.mxu0 0.0
    %544 = vmatpush2.msra.mxu0 0.0
    %545 = vmatprep.subr.mxu0 0.0
    %546 = vmatpush2.msra.mxu0 0.0
    %547 = vmatprep.subr.mxu0 0.0
    %548 = vmatpush2.msra.mxu0 0.0
    %549 = vmatprep.subr.mxu0 0.0
    %550 = vmatpush2.msra.mxu0 0.0
    %551 = vmatprep.subr.mxu0 0.0
    %552 = vmatpush2.msra.mxu0 0.0
    %553 = vmatprep.subr.mxu0 0.0
    %554 = vmatpush2.msra.mxu0 0.0
    %555 = vmatprep.subr.mxu0 0.0
    %556 = vmatpush2.msra.mxu0 0.0
    %557 = vmatprep.mubr.f32.mxu0 0.0
    %558 = vmatmul.mubr.f32.gmra.mxu0 %v491
    %v559 = vpop.f32.mrf.mxu0
    %v560 = vadd.f32 %v54, %v559
    %v561 = vpop.f32.mrf.mxu0
    %562 = vdwg.mxu0
    %v563 = vxor.u32 %v560, 2147483648
    %v564 = vmul.f32 %v563, 1.442695
    %v565 = vpow.pop %v564
    %v566 = vadd.f32 %v565, 1.0
    %v567 = vrcp.pop %v566
    %v568 = vmul.f32 1.0, %v567
    %v569 = vtanh.pop %v560
    %v570 = vmul.f32 %v568, %v476
    %572 = vrot.lane.b32.xlu0 %v569, 64
    %v573 = vpop.permute.xlu0 %572
    %v575 = vmul.f32 %v568, %v573
    %577 = vrot.lane.b32.xlu0 %v575, 32
    %v578 = vpop.permute.xlu0 %577
    %v580 = vadd.f32 %v570, %v578
    %v581 = vtanh.pop %v580
    %583 = vrot.lane.b32.xlu0 %v581, 64
    %v584 = vpop.permute.xlu0 %583
    %v586 = vmul.f32 %v568, %v584
    %s587 = scalar_lea.vmem %s0, 10
    %v588 = vld [vmem:[%s587] sm:$0x3]
    %590 = vrot.lane.b32.xlu0 %v586, 36
    %v591 = vpop.permute.xlu0 %590
    %v593 = vsel %vm63, %v588, %v591
    %v595 = vsel %vm65, %v593, 0
    %597 = vmatprep.subr.mxu0 0.0
    %598 = vmatpush1.msra.mxu0 0.0
    %599 = vmatprep.subr.mxu0 0.0
    %600 = vmatpush1.msra.mxu0 0.0
    %601 = vmatprep.subr.mxu0 0.0
    %602 = vmatpush1.msra.mxu0 0.0
    %603 = vmatprep.subr.mxu0 0.0
    %604 = vmatpush1.msra.mxu0 0.0
    %605 = vmatprep.subr.mxu0 0.0
    %606 = vmatpush1.msra.mxu0 0.0
    %607 = vmatprep.subr.mxu0 0.0
    %608 = vmatpush1.msra.mxu0 0.0
    %609 = vmatprep.subr.mxu0 0.0
    %610 = vmatpush1.msra.mxu0 0.0
    %611 = vmatprep.subr.mxu0 0.0
    %612 = vmatpush1.msra.mxu0 0.0
    %613 = vmatprep.subr.mxu0 0.0
    %614 = vmatpush1.msra.mxu0 0.0
    %615 = vmatprep.subr.mxu0 0.0
    %616 = vmatpush1.msra.mxu0 0.0
    %617 = vmatprep.subr.mxu0 0.0
    %618 = vmatpush1.msra.mxu0 0.0
    %619 = vmatprep.subr.mxu0 0.0
    %620 = vmatpush1.msra.mxu0 %v71
    %621 = vmatprep.subr.mxu0 0.0
    %622 = vmatpush1.msra.mxu0 %v47
    %623 = vmatprep.subr.mxu0 0.0
    %624 = vmatpush1.msra.mxu0 %v46
    %625 = vmatprep.subr.mxu0 0.0
    %626 = vmatpush1.msra.mxu0 %v45
    %627 = vmatprep.subr.mxu0 0.0
    %628 = vmatpush1.msra.mxu0 %v44
    %629 = vmatprep.subr.mxu0 0.0
    %630 = vmatpush2.msra.mxu0 0.0
    %631 = vmatprep.subr.mxu0 0.0
    %632 = vmatpush2.msra.mxu0 0.0
    %633 = vmatprep.subr.mxu0 0.0
    %634 = vmatpush2.msra.mxu0 0.0
    %635 = vmatprep.subr.mxu0 0.0
    %636 = vmatpush2.msra.mxu0 0.0
    %637 = vmatprep.subr.mxu0 0.0
    %638 = vmatpush2.msra.mxu0 0.0
    %639 = vmatprep.subr.mxu0 0.0
    %640 = vmatpush2.msra.mxu0 0.0
    %641 = vmatprep.subr.mxu0 0.0
    %642 = vmatpush2.msra.mxu0 0.0
    %643 = vmatprep.subr.mxu0 0.0
    %644 = vmatpush2.msra.mxu0 0.0
    %645 = vmatprep.subr.mxu0 0.0
    %646 = vmatpush2.msra.mxu0 0.0
    %647 = vmatprep.subr.mxu0 0.0
    %648 = vmatpush2.msra.mxu0 0.0
    %649 = vmatprep.subr.mxu0 0.0
    %650 = vmatpush2.msra.mxu0 0.0
    %651 = vmatprep.subr.mxu0 0.0
    %652 = vmatpush2.msra.mxu0 0.0
    %653 = vmatprep.subr.mxu0 0.0
    %654 = vmatpush2.msra.mxu0 0.0
    %655 = vmatprep.subr.mxu0 0.0
    %656 = vmatpush2.msra.mxu0 0.0
    %657 = vmatprep.subr.mxu0 0.0
    %658 = vmatpush2.msra.mxu0 0.0
    %659 = vmatprep.subr.mxu0 0.0
    %660 = vmatpush2.msra.mxu0 0.0
    %661 = vmatprep.mubr.f32.mxu0 0.0
    %662 = vmatmul.mubr.f32.gmra.mxu0 %v595
    %v663 = vpop.f32.mrf.mxu0
    %v664 = vadd.f32 %v54, %v663
    %v665 = vpop.f32.mrf.mxu0
    %666 = vdwg.mxu0
    %v667 = vxor.u32 %v664, 2147483648
    %v668 = vmul.f32 %v667, 1.442695
    %v669 = vpow.pop %v668
    %v670 = vadd.f32 %v669, 1.0
    %v671 = vrcp.pop %v670
    %v672 = vmul.f32 1.0, %v671
    %v673 = vtanh.pop %v664
    %v674 = vmul.f32 %v672, %v580
    %676 = vrot.lane.b32.xlu0 %v673, 64
    %v677 = vpop.permute.xlu0 %676
    %v679 = vmul.f32 %v672, %v677
    %681 = vrot.lane.b32.xlu0 %v679, 32
    %v682 = vpop.permute.xlu0 %681
    %v684 = vadd.f32 %v674, %v682
    %v685 = vtanh.pop %v684
    %687 = vrot.lane.b32.xlu0 %v685, 64
    %v688 = vpop.permute.xlu0 %687
    %v690 = vmul.f32 %v672, %v688
    %s691 = scalar_lea.vmem %s0, 12
    %v692 = vld [vmem:[%s691] sm:$0x3]
    %694 = vrot.lane.b32.xlu0 %v690, 36
    %v695 = vpop.permute.xlu0 %694
    %v697 = vsel %vm63, %v692, %v695
    %v699 = vsel %vm65, %v697, 0
    %701 = vmatprep.subr.mxu0 0.0
    %702 = vmatpush1.msra.mxu0 0.0
    %703 = vmatprep.subr.mxu0 0.0
    %704 = vmatpush1.msra.mxu0 0.0
    %705 = vmatprep.subr.mxu0 0.0
    %706 = vmatpush1.msra.mxu0 0.0
    %707 = vmatprep.subr.mxu0 0.0
    %708 = vmatpush1.msra.mxu0 0.0
    %709 = vmatprep.subr.mxu0 0.0
    %710 = vmatpush1.msra.mxu0 0.0
    %711 = vmatprep.subr.mxu0 0.0
    %712 = vmatpush1.msra.mxu0 0.0
    %713 = vmatprep.subr.mxu0 0.0
    %714 = vmatpush1.msra.mxu0 0.0
    %715 = vmatprep.subr.mxu0 0.0
    %716 = vmatpush1.msra.mxu0 0.0
    %717 = vmatprep.subr.mxu0 0.0
    %718 = vmatpush1.msra.mxu0 0.0
    %719 = vmatprep.subr.mxu0 0.0
    %720 = vmatpush1.msra.mxu0 0.0
    %721 = vmatprep.subr.mxu0 0.0
    %722 = vmatpush1.msra.mxu0 0.0
    %723 = vmatprep.subr.mxu0 0.0
    %724 = vmatpush1.msra.mxu0 %v71
    %725 = vmatprep.subr.mxu0 0.0
    %726 = vmatpush1.msra.mxu0 %v47
    %727 = vmatprep.subr.mxu0 0.0
    %728 = vmatpush1.msra.mxu0 %v46
    %729 = vmatprep.subr.mxu0 0.0
    %730 = vmatpush1.msra.mxu0 %v45
    %731 = vmatprep.subr.mxu0 0.0
    %732 = vmatpush1.msra.mxu0 %v44
    %733 = vmatprep.subr.mxu0 0.0
    %734 = vmatpush2.msra.mxu0 0.0
    %735 = vmatprep.subr.mxu0 0.0
    %736 = vmatpush2.msra.mxu0 0.0
    %737 = vmatprep.subr.mxu0 0.0
    %738 = vmatpush2.msra.mxu0 0.0
    %739 = vmatprep.subr.mxu0 0.0
    %740 = vmatpush2.msra.mxu0 0.0
    %741 = vmatprep.subr.mxu0 0.0
    %742 = vmatpush2.msra.mxu0 0.0
    %743 = vmatprep.subr.mxu0 0.0
    %744 = vmatpush2.msra.mxu0 0.0
    %745 = vmatprep.subr.mxu0 0.0
    %746 = vmatpush2.msra.mxu0 0.0
    %747 = vmatprep.subr.mxu0 0.0
    %748 = vmatpush2.msra.mxu0 0.0
    %749 = vmatprep.subr.mxu0 0.0
    %750 = vmatpush2.msra.mxu0 0.0
    %751 = vmatprep.subr.mxu0 0.0
    %752 = vmatpush2.msra.mxu0 0.0
    %753 = vmatprep.subr.mxu0 0.0
    %754 = vmatpush2.msra.mxu0 0.0
    %755 = vmatprep.subr.mxu0 0.0
    %756 = vmatpush2.msra.mxu0 0.0
    %757 = vmatprep.subr.mxu0 0.0
    %758 = vmatpush2.msra.mxu0 0.0
    %759 = vmatprep.subr.mxu0 0.0
    %760 = vmatpush2.msra.mxu0 0.0
    %761 = vmatprep.subr.mxu0 0.0
    %762 = vmatpush2.msra.mxu0 0.0
    %763 = vmatprep.subr.mxu0 0.0
    %764 = vmatpush2.msra.mxu0 0.0
    %765 = vmatprep.mubr.f32.mxu0 0.0
    %766 = vmatmul.mubr.f32.gmra.mxu0 %v699
    %v767 = vpop.f32.mrf.mxu0
    %v768 = vadd.f32 %v54, %v767
    %v769 = vpop.f32.mrf.mxu0
    %770 = vdwg.mxu0
    %v771 = vxor.u32 %v768, 2147483648
    %v772 = vmul.f32 %v771, 1.442695
    %v773 = vpow.pop %v772
    %v774 = vadd.f32 %v773, 1.0
    %v775 = vrcp.pop %v774
    %v776 = vmul.f32 1.0, %v775
    %v777 = vtanh.pop %v768
    %v778 = vmul.f32 %v776, %v684
    %780 = vrot.lane.b32.xlu0 %v777, 64
    %v781 = vpop.permute.xlu0 %780
    %v783 = vmul.f32 %v776, %v781
    %785 = vrot.lane.b32.xlu0 %v783, 32
    %v786 = vpop.permute.xlu0 %785
    %v788 = vadd.f32 %v778, %v786
    %v789 = vtanh.pop %v788
    %791 = vrot.lane.b32.xlu0 %v789, 64
    %v792 = vpop.permute.xlu0 %791
    %v794 = vmul.f32 %v776, %v792
    %s795 = scalar_lea.vmem %s0, 14
    %v796 = vld [vmem:[%s795] sm:$0x3]
    %798 = vrot.lane.b32.xlu0 %v794, 36
    %v799 = vpop.permute.xlu0 %798
    %v801 = vsel %vm63, %v796, %v799
    %v803 = vsel %vm65, %v801, 0
    %805 = vmatprep.subr.mxu0 0.0
    %806 = vmatpush1.msra.mxu0 0.0
    %807 = vmatprep.subr.mxu0 0.0
    %808 = vmatpush1.msra.mxu0 0.0
    %809 = vmatprep.subr.mxu0 0.0
    %810 = vmatpush1.msra.mxu0 0.0
    %811 = vmatprep.subr.mxu0 0.0
    %812 = vmatpush1.msra.mxu0 0.0
    %813 = vmatprep.subr.mxu0 0.0
    %814 = vmatpush1.msra.mxu0 0.0
    %815 = vmatprep.subr.mxu0 0.0
    %816 = vmatpush1.msra.mxu0 0.0
    %817 = vmatprep.subr.mxu0 0.0
    %818 = vmatpush1.msra.mxu0 0.0
    %819 = vmatprep.subr.mxu0 0.0
    %820 = vmatpush1.msra.mxu0 0.0
    %821 = vmatprep.subr.mxu0 0.0
    %822 = vmatpush1.msra.mxu0 0.0
    %823 = vmatprep.subr.mxu0 0.0
    %824 = vmatpush1.msra.mxu0 0.0
    %825 = vmatprep.subr.mxu0 0.0
    %826 = vmatpush1.msra.mxu0 0.0
    %827 = vmatprep.subr.mxu0 0.0
    %828 = vmatpush1.msra.mxu0 %v71
    %829 = vmatprep.subr.mxu0 0.0
    %830 = vmatpush1.msra.mxu0 %v47
    %831 = vmatprep.subr.mxu0 0.0
    %832 = vmatpush1.msra.mxu0 %v46
    %833 = vmatprep.subr.mxu0 0.0
    %834 = vmatpush1.msra.mxu0 %v45
    %835 = vmatprep.subr.mxu0 0.0
    %836 = vmatpush1.msra.mxu0 %v44
    %837 = vmatprep.subr.mxu0 0.0
    %838 = vmatpush2.msra.mxu0 0.0
    %839 = vmatprep.subr.mxu0 0.0
    %840 = vmatpush2.msra.mxu0 0.0
    %841 = vmatprep.subr.mxu0 0.0
    %842 = vmatpush2.msra.mxu0 0.0
    %843 = vmatprep.subr.mxu0 0.0
    %844 = vmatpush2.msra.mxu0 0.0
    %845 = vmatprep.subr.mxu0 0.0
    %846 = vmatpush2.msra.mxu0 0.0
    %847 = vmatprep.subr.mxu0 0.0
    %848 = vmatpush2.msra.mxu0 0.0
    %849 = vmatprep.subr.mxu0 0.0
    %850 = vmatpush2.msra.mxu0 0.0
    %851 = vmatprep.subr.mxu0 0.0
    %852 = vmatpush2.msra.mxu0 0.0
    %853 = vmatprep.subr.mxu0 0.0
    %854 = vmatpush2.msra.mxu0 0.0
    %855 = vmatprep.subr.mxu0 0.0
    %856 = vmatpush2.msra.mxu0 0.0
    %857 = vmatprep.subr.mxu0 0.0
    %858 = vmatpush2.msra.mxu0 0.0
    %859 = vmatprep.subr.mxu0 0.0
    %860 = vmatpush2.msra.mxu0 0.0
    %861 = vmatprep.subr.mxu0 0.0
    %862 = vmatpush2.msra.mxu0 0.0
    %863 = vmatprep.subr.mxu0 0.0
    %864 = vmatpush2.msra.mxu0 0.0
    %865 = vmatprep.subr.mxu0 0.0
    %866 = vmatpush2.msra.mxu0 0.0
    %867 = vmatprep.subr.mxu0 0.0
    %868 = vmatpush2.msra.mxu0 0.0
    %869 = vmatprep.mubr.f32.mxu0 0.0
    %870 = vmatmul.mubr.f32.gmra.mxu0 %v803
    %v871 = vpop.f32.mrf.mxu0
    %v872 = vadd.f32 %v54, %v871
    %v873 = vpop.f32.mrf.mxu0
    %874 = vdwg.mxu0
    %v875 = vxor.u32 %v872, 2147483648
    %v876 = vmul.f32 %v875, 1.442695
    %v877 = vpow.pop %v876
    %v878 = vadd.f32 %v877, 1.0
    %v879 = vrcp.pop %v878
    %v880 = vmul.f32 1.0, %v879
    %v881 = vtanh.pop %v872
    %v882 = vmul.f32 %v880, %v788
    %884 = vrot.lane.b32.xlu0 %v881, 64
    %v885 = vpop.permute.xlu0 %884
    %v887 = vmul.f32 %v880, %v885
    %889 = vrot.lane.b32.xlu0 %v887, 32
    %v890 = vpop.permute.xlu0 %889
    %v892 = vadd.f32 %v882, %v890
    %v893 = vtanh.pop %v892
    %895 = vrot.lane.b32.xlu0 %v893, 64
    %v896 = vpop.permute.xlu0 %895
    %v898 = vmul.f32 %v880, %v896
    %900 = vrot.lane.b32.xlu0 %v898, 32
    %v901 = vpop.permute.xlu0 %900
    %vm903 = vcmask 254976
    %904 = vst.msk [vmem:[#allocation2] sm:$0x3] %vm903, %v901
    %906 = vrot.lane.b32.xlu0 %v892, 96
    %v907 = vpop.permute.xlu0 %906
    %909 = vst.msk [vmem:[#allocation3] sm:$0x3] %vm903, %v907
    // Predicated region
    $region30: #{tpu_custom_call.1} parent=1 // pred_check
      %p910 = pneg %p35
    $region31: #{tpu_custom_call.1} parent=1 // pred_check_branch
      %912 = sbr.rel (%p910) target = $region33
    $region32: #{tpu_custom_call.1} parent=1 // pred_region
      %913 = vst.msk [vmem:[#allocation7] sm:$0x3] %vm903, %v901
    $region33: #{tpu_custom_call.1} parent=1 // pred_fallthru
      _
    // Predicated region
    $region34: #{tpu_custom_call.1} parent=1 // pred_check
      _
    $region35: #{tpu_custom_call.1} parent=1 // pred_check_branch
      %915 = sbr.rel (0) target = $region37
    $region36: #{tpu_custom_call.1} parent=1 // pred_region
      %s917 = ssub.s32 32, 32
      %918 = vsyncadd [#allocation6], %s917
      %s920 = sshll.u32 [#allocation7], 4
      %s921 = int_to_ptr.vmem [resolvable:$true] %s920
      %923 = dma.vmem_to_hbm [thread:$0]  %s921, 32, %s5, [#allocation6]
    $region37: #{tpu_custom_call.1} parent=1 // pred_fallthru
      _
    // Predicated region
    $region38: #{tpu_custom_call.1} parent=1 // pred_check
      _
    $region39: #{tpu_custom_call.1} parent=1 // pred_check_branch
      %925 = sbr.rel (0) target = $region41
    $region40: #{tpu_custom_call.1} parent=1 // pred_region
      %926 = dma.done [#allocation6], 32
    $region41: #{tpu_custom_call.1} parent=1 // pred_fallthru
      _
    %927 = vsyncpa [#allocation5], 1
    %928 = vsyncpa [#allocation6], 1

</llo_original>
